<compile_context>
chip_gen: v6e
topology: v6e:2x2x1
jax: 0.10.0
libtpu: 0.0.40
codegen_flags: <defaults>
</compile_context>

<pallas_src>
import functools

import jax
import jax.numpy as jnp
from jax.experimental import pallas as pl
from jax.experimental.pallas import tpu as pltpu


def _integration_kernel(ov_ref, enh_ref, red_ref, out_ref, *,
                        min_iou, enhance_weight_max, reduce_weight_max):
    # ov_ref : (TILE_N, 1) f32 IoUs for the samples covered by this tile.
    # enh/red/out : (TILE_N, TILE_F) tiles of the flattened (N, F) features.
    w = (ov_ref[...] - min_iou) / (1.0 - min_iou)
    w = jnp.minimum(jnp.maximum(w, 0.0), 1.0)          # clamp to [0, 1]

    enh = enh_ref[...].astype(jnp.float32)
    red = red_ref[...].astype(jnp.float32)
    # enh*(e_max*w) - red*(r_max*w) == w * (e_max*enh - r_max*red); the
    # factored form uses a single lane-broadcast of the per-row weight.
    combined = enhance_weight_max * enh - reduce_weight_max * red
    out_ref[...] = (w * combined).astype(out_ref.dtype)


def _round_up(x, m):
    return ((x + m - 1) // m) * m


def integration_module(enhance_feature, reduce_feature, overlaps,
                       min_iou=0.2, enhance_weight_max=1.0,
                       reduce_weight_max=1.0, *,
                       target_tile_bytes=4 * 1024 * 1024):
    """enhance_feature / reduce_feature: (N, C, H, W); overlaps: (N,)."""
    if not (min_iou < 1.0):
        raise ValueError("min_iou must be < 1.0 (weight would be inf)")
    if enhance_feature.shape != reduce_feature.shape:
        raise ValueError("enhance_feature and reduce_feature must match")

    shape = enhance_feature.shape
    N = shape[0]
    F = 1
    for d in shape[1:]:
        F *= d
    dtype = enhance_feature.dtype
    itemsize = jnp.dtype(dtype).itemsize

    # --- tile selection ---------------------------------------------------
    # Lane-dense (TILE_N, TILE_F) tiles of the (N, F) view, ~target_tile_bytes
    # per array.  Block dims are multiples of (8, 128) or full-extent, and
    # never exceed the array dims; ragged edges become partial boundary
    # blocks, which Pallas masks automatically (no host-side padding).
    target_elems = max(target_tile_bytes // itemsize, 8 * 128)

    tile_f_cap = max(128, ((target_elems // 8) // 128) * 128)
    if F <= 128:
        tile_f = F                                   # full-extent lane block
    else:
        tile_f = min(tile_f_cap, (F // 128) * 128)
    tile_f_padded = _round_up(tile_f, 128)

    tile_n_cap = max(8, ((target_elems // tile_f_padded) // 8) * 8)
    if N <= 8:
        tile_n = N                                   # full-extent sample block
    else:
        tile_n = min(tile_n_cap, (N // 8) * 8)

    grid = (pl.cdiv(N, tile_n), pl.cdiv(F, tile_f))

    feat_spec = pl.BlockSpec((tile_n, tile_f), lambda nb, fb: (nb, fb))
    w_spec = pl.BlockSpec((tile_n, 1), lambda nb, fb: (nb, 0))

    # --- metadata-only reshapes (no HBM traffic) ---------------------------
    enh2d = enhance_feature.reshape(N, F)
    red2d = reduce_feature.reshape(N, F)
    ov2d = overlaps.reshape(N, 1).astype(jnp.float32)

    kernel = functools.partial(
        _integration_kernel,
        min_iou=float(min_iou),
        enhance_weight_max=float(enhance_weight_max),
        reduce_weight_max=float(reduce_weight_max),
    )

    # Double-buffered working set: (2 inputs + 1 output) feature tiles plus
    # the tiny lane-padded weight tile; margin for internal scratch.  Clamp to
    # [16 MiB, 32 MiB] so v5e gets the raise it needs and v7x never overflows.
    tile_buf_bytes = _round_up(tile_n, 8) * tile_f_padded * itemsize
    w_buf_bytes = _round_up(tile_n, 8) * 128 * 4
    needed = 2 * (3 * tile_buf_bytes + w_buf_bytes) + (2 << 20)
    vmem_limit = int(min(max(needed, 16 * 1024 * 1024), 32 * 1024 * 1024))

    cost = pl.CostEstimate(
        flops=3 * N * F,                              # 2 mul + 1 sub / element
        transcendentals=0,
        bytes_accessed=3 * N * F * itemsize + N * 4,  # 2 reads + 1 write + IoUs
    )

    out2d = pl.pallas_call(
        kernel,
        out_shape=jax.ShapeDtypeStruct((N, F), dtype),
        grid=grid,
        in_specs=[w_spec, feat_spec, feat_spec],
        out_specs=feat_spec,
        compiler_params=pltpu.CompilerParams(
            dimension_semantics=("parallel", "parallel"),
            vmem_limit_bytes=vmem_limit),
        cost_estimate=cost,
    )(ov2d, enh2d, red2d)

    return out2d.reshape(shape)


def _reference(enhance_feature, reduce_feature, overlaps,
               min_iou=0.2, enhance_weight_max=1.0, reduce_weight_max=1.0):
    def cw(ious, wmax):
        return wmax * jnp.clip((ious - min_iou) / (1.0 - min_iou), 0.0, 1.0)
    ew = cw(overlaps, enhance_weight_max)[:, None, None, None]
    rw = cw(overlaps, reduce_weight_max)[:, None, None, None]
    return enhance_feature * ew - reduce_feature * rw


if __name__ == "__main__":
    key = jax.random.PRNGKey(0)
    keys = jax.random.split(key, 9)

    # Case 1: lane-aligned feature size (F = 1024).
    N, C, H, W = 2, 4, 16, 16
    enh = jax.random.normal(keys[0], (N, C, H, W), dtype=jnp.float32)
    red = jax.random.normal(keys[1], (N, C, H, W), dtype=jnp.float32)
    ov = jax.random.uniform(keys[2], (N,), dtype=jnp.float32)
    out = jax.block_until_ready(integration_module(enh, red, ov))
    ref = _reference(enh, red, ov)
    assert out.shape == (N, C, H, W)
    assert jnp.allclose(out, ref, atol=1e-5, rtol=1e-5)

    # Case 2: ragged feature size (F = 105) -> partial lane block, no host pad.
    N2, C2, H2, W2 = 2, 3, 5, 7
    enh2 = jax.random.normal(keys[3], (N2, C2, H2, W2), dtype=jnp.float32)
    red2 = jax.random.normal(keys[4], (N2, C2, H2, W2), dtype=jnp.float32)
    ov2 = jax.random.uniform(keys[5], (N2,), dtype=jnp.float32)
    out2 = jax.block_until_ready(integration_module(enh2, red2, ov2))
    ref2 = _reference(enh2, red2, ov2)
    assert out2.shape == (N2, C2, H2, W2)
    assert jnp.allclose(out2, ref2, atol=1e-5, rtol=1e-5)

    # Case 3: several samples per tile + partial sample block + custom params.
    N3, C3, H3, W3 = 10, 2, 4, 8
    enh3 = jax.random.normal(keys[6], (N3, C3, H3, W3), dtype=jnp.float32)
    red3 = jax.random.normal(keys[7], (N3, C3, H3, W3), dtype=jnp.float32)
    ov3 = jax.random.uniform(keys[8], (N3,), dtype=jnp.float32)
    kwargs = dict(min_iou=0.3, enhance_weight_max=0.8, reduce_weight_max=0.5)
    out3 = jax.block_until_ready(integration_module(enh3, red3, ov3, **kwargs))
    ref3 = _reference(enh3, red3, ov3, **kwargs)
    assert out3.shape == (N3, C3, H3, W3)
    assert jnp.allclose(out3, ref3, atol=1e-5, rtol=1e-5)

    print("KERNEL_OK")
</pallas_src>

<mosaic_0001>
module attributes {stable_mosaic.version = 11 : i64} {
  func.func @_integration_kernel(%arg0: i32, %arg1: i32, %arg2: memref<2x1xf32, #tpu.memory_space<vmem>>, %arg3: memref<2x1024xf32, #tpu.memory_space<vmem>>, %arg4: memref<2x1024xf32, #tpu.memory_space<vmem>>, %arg5: memref<2x1024xf32, #tpu.memory_space<vmem>>) attributes {dimension_semantics = [#tpu.dimension_semantics<parallel>, #tpu.dimension_semantics<parallel>], iteration_bounds = array<i64: 1, 1>, scalar_prefetch = 0 : i64, scratch_operands = 0 : i64, tpu.core_type = #tpu.core_type<tc>, window_params = [{transform_indices = @transform_0, window_bounds = array<i64: 2, 1>}, {transform_indices = @transform_1, window_bounds = array<i64: 2, 1024>}, {transform_indices = @transform_2, window_bounds = array<i64: 2, 1024>}, {transform_indices = @transform_3, window_bounds = array<i64: 2, 1024>}]} {
    %c0 = arith.constant 0 : index
    %c0_0 = arith.constant 0 : index
    %0 = vector.load %arg2[%c0, %c0_0] : memref<2x1xf32, #tpu.memory_space<vmem>>, vector<2x1xf32>
    %cst = arith.constant 2.000000e-01 : f32
    %1 = vector.broadcast %cst : f32 to vector<2x1xf32>
    %2 = arith.subf %0, %1 : vector<2x1xf32>
    %cst_1 = arith.constant 8.000000e-01 : f32
    %3 = vector.broadcast %cst_1 : f32 to vector<2x1xf32>
    %4 = arith.divf %2, %3 : vector<2x1xf32>
    %cst_2 = arith.constant 0.000000e+00 : f32
    %5 = vector.broadcast %cst_2 : f32 to vector<2x1xf32>
    %6 = arith.maximumf %4, %5 : vector<2x1xf32>
    %cst_3 = arith.constant 1.000000e+00 : f32
    %7 = vector.broadcast %cst_3 : f32 to vector<2x1xf32>
    %8 = arith.minimumf %6, %7 : vector<2x1xf32>
    %c0_4 = arith.constant 0 : index
    %c0_5 = arith.constant 0 : index
    %9 = vector.load %arg3[%c0_4, %c0_5] : memref<2x1024xf32, #tpu.memory_space<vmem>>, vector<2x1024xf32>
    %c0_6 = arith.constant 0 : index
    %c0_7 = arith.constant 0 : index
    %10 = vector.load %arg4[%c0_6, %c0_7] : memref<2x1024xf32, #tpu.memory_space<vmem>>, vector<2x1024xf32>
    %cst_8 = arith.constant 1.000000e+00 : f32
    %11 = vector.broadcast %cst_8 : f32 to vector<2x1024xf32>
    %12 = arith.mulf %11, %9 : vector<2x1024xf32>
    %cst_9 = arith.constant 1.000000e+00 : f32
    %13 = vector.broadcast %cst_9 : f32 to vector<2x1024xf32>
    %14 = arith.mulf %13, %10 : vector<2x1024xf32>
    %15 = arith.subf %12, %14 : vector<2x1024xf32>
    %16 = vector.broadcast %8 : vector<2x1xf32> to vector<2x1024xf32>
    %17 = arith.mulf %16, %15 : vector<2x1024xf32>
    %c0_10 = arith.constant 0 : index
    %c0_11 = arith.constant 0 : index
    %18 = vector.load %arg5[%c0_10, %c0_11] : memref<2x1024xf32, #tpu.memory_space<vmem>>, vector<2x1024xf32>
    tpu.vector_store %arg5[%c0_10, %c0_11], %17 {strides = array<i32>} : memref<2x1024xf32, #tpu.memory_space<vmem>>, vector<2x1024xf32>,
    return
  }
  func.func @transform_0(%arg0: i32, %arg1: i32) -> (i32, i32) {
    %c0_i32 = arith.constant 0 : i32
    %c0_i32_0 = arith.constant 0 : i32
    return %arg0, %c0_i32 : i32, i32
  }
  func.func @transform_1(%arg0: i32, %arg1: i32) -> (i32, i32) {
    %c0_i32 = arith.constant 0 : i32
    return %arg0, %arg1 : i32, i32
  }
  func.func @transform_2(%arg0: i32, %arg1: i32) -> (i32, i32) {
    %c0_i32 = arith.constant 0 : i32
    return %arg0, %arg1 : i32, i32
  }
  func.func @transform_3(%arg0: i32, %arg1: i32) -> (i32, i32) {
    %c0_i32 = arith.constant 0 : i32
    return %arg0, %arg1 : i32, i32
  }
}

</mosaic_0001>

<llo_original>
// kernel: tpu_custom_call.1
$region0: #{tpu_custom_call.1}
  #allocation0 [shape = 'u32[]', space=smem, size = 0x4, offset = 0x4, fixed_abs, tag = 'smem constant byte address 0x4 - core index']
  #allocation1 [shape = 'u32[144,128]{1,0:T(1,128)}', space=vmem, size = 0x12000, scoped, tag = 'internal scratch']
  %s0 = inlined_call_operand.vmem [shape: f32[2,1], index: 0, kind: input, shape index: {}]
  %s1 = inlined_call_operand.hbm [shape: f32[2,1024], index: 1, kind: input, shape index: {}]
  %s2 = inlined_call_operand.hbm [shape: f32[2,1024], index: 2, kind: input, shape index: {}]
  %s3 = inlined_call_operand.hbm [shape: f32[2,1024], index: 3, kind: output, shape index: {}]
  %s4 = sld [smem:[#allocation0]]
  $region30: #{tpu_custom_call.1} parent=0
    _
  %s6 = ssub.s32 1, %s4
  %s7 = scalar_select 0, %s6, %s4
  $region1: #{tpu_custom_call.1} parent=0
    #allocation2 [shape = 'u8[8192]{0}', space=vmem, size = 0x2000, scoped, tag = 'input window, operand 1, single buffered']
    #allocation3 [shape = 's32[1]{0}', space=sflag, size = 0x4, scoped, tag = 'scoped memory for tpu_custom_call.1']
    #allocation4 [shape = 's32[1]{0}', space=sflag, size = 0x4, scoped, tag = 'scoped memory for tpu_custom_call.1']
    #allocation5 [shape = 'u8[8192]{0}', space=vmem, size = 0x2000, scoped, tag = 'input window, operand 2, single buffered']
    #allocation6 [shape = 's32[1]{0}', space=sflag, size = 0x4, scoped, tag = 'scoped memory for tpu_custom_call.1']
    #allocation7 [shape = 'u8[8192]{0}', space=vmem, size = 0x2000, scoped, tag = 'output window, operand 0, single buffered']
    %8 = vsyncpa [#allocation3], 0
    %9 = vsyncpa [#allocation6], 0
    %10 = vsyncpa [#allocation4], 0
    // Predicated region
    $region2: #{tpu_custom_call.1} parent=1 // pred_check
      _
    $region3: #{tpu_custom_call.1} parent=1 // pred_check_branch
      %12 = sbr.rel (0) target = $region5
    $region4: #{tpu_custom_call.1} parent=1 // pred_region
      _
    $region5: #{tpu_custom_call.1} parent=1 // pred_fallthru
      _
    // Predicated region
    $region6: #{tpu_custom_call.1} parent=1 // pred_check
      _
    $region7: #{tpu_custom_call.1} parent=1 // pred_check_branch
      %14 = sbr.rel (0) target = $region9
    $region8: #{tpu_custom_call.1} parent=1 // pred_region
      %s16 = ssub.s32 256, 256
      %17 = vsyncadd [#allocation3], %s16
      %s19 = sshll.u32 [#allocation2], 4
      %s20 = int_to_ptr.vmem [resolvable:$true] %s19
      %22 = dma.hbm_to_vmem [thread:$0]  %s1, 256, %s20, [#allocation3]
    $region9: #{tpu_custom_call.1} parent=1 // pred_fallthru
      _
    // Predicated region
    $region10: #{tpu_custom_call.1} parent=1 // pred_check
      _
    $region11: #{tpu_custom_call.1} parent=1 // pred_check_branch
      %24 = sbr.rel (0) target = $region13
    $region12: #{tpu_custom_call.1} parent=1 // pred_region
      %s26 = ssub.s32 256, 256
      %27 = vsyncadd [#allocation6], %s26
      %s29 = sshll.u32 [#allocation5], 4
      %s30 = int_to_ptr.vmem [resolvable:$true] %s29
      %32 = dma.hbm_to_vmem [thread:$0]  %s2, 256, %s30, [#allocation6]
    $region13: #{tpu_custom_call.1} parent=1 // pred_fallthru
      _
    // Predicated region
    $region14: #{tpu_custom_call.1} parent=1 // pred_check
      _
    $region15: #{tpu_custom_call.1} parent=1 // pred_check_branch
      %34 = sbr.rel (0) target = $region17
    $region16: #{tpu_custom_call.1} parent=1 // pred_region
      %35 = dma.done [#allocation3], 256
    $region17: #{tpu_custom_call.1} parent=1 // pred_fallthru
      _
    // Predicated region
    $region18: #{tpu_custom_call.1} parent=1 // pred_check
      _
    $region19: #{tpu_custom_call.1} parent=1 // pred_check_branch
      %37 = sbr.rel (0) target = $region21
    $region20: #{tpu_custom_call.1} parent=1 // pred_region
      %38 = dma.done [#allocation6], 256
    $region21: #{tpu_custom_call.1} parent=1 // pred_fallthru
      _
    %v39 = vld [vmem:[%s0] sm:$0x3]
    %v40 = vsub.f32 %v39, 0.2
    %v41 = vrcp.pop 0.8
    %v42 = vmul.f32 %v40, %v41
    %v43 = vmax.f32 %v42, 0.0
    %v44 = vmin.f32 %v43, 1.0
    %v45 = vld [vmem:[#allocation2] sm:$0xff]
    %v46 = vld [vmem:[#allocation2 + $0x8] sm:$0xff]
    %v47 = vld [vmem:[#allocation5] sm:$0xff]
    %v48 = vld [vmem:[#allocation5 + $0x8] sm:$0xff]
    %v49 = vsub.f32 %v45, %v47
    %v50 = vsub.f32 %v46, %v48
    %52 = vset.pattern.permute.xlu0 0
    %53 = vperm.xlu0 %52, %v44
    %v54 = vpop.permute.xlu0 %53
    %v58 = vcombine.high %v49, %v49
    %v60 = vunpack.c.l.s4 1983009808
    %v61 = vunpack.c.0.s8 %v60
    %v62 = vlaneseq
    %v63 = vshrl.u32 %v62, 7
    %v64 = vsub.s32 %v61, %v63
    %v65 = vrot.slane %v49, %v64
    %v67 = vunpack.c.l.s4 1983009808
    %v68 = vunpack.c.0.s8 %v67
    %v69 = vlaneseq
    %v70 = vshrl.u32 %v69, 7
    %v71 = vsub.s32 %v68, %v70
    %v72 = vrot.slane %v58, %v71
    %v73 = vcombine.high %v65, %v65
    %v74 = vcombine.high %v72, %v72
    %v75 = vcombine.high %v50, %v50
    %v77 = vunpack.c.l.s4 1983009808
    %v78 = vunpack.c.0.s8 %v77
    %v79 = vlaneseq
    %v80 = vshrl.u32 %v79, 7
    %v81 = vsub.s32 %v78, %v80
    %v82 = vrot.slane %v50, %v81
    %v84 = vunpack.c.l.s4 1983009808
    %v85 = vunpack.c.0.s8 %v84
    %v86 = vlaneseq
    %v87 = vshrl.u32 %v86, 7
    %v88 = vsub.s32 %v85, %v87
    %v89 = vrot.slane %v75, %v88
    %v90 = vcombine.high %v82, %v82
    %v91 = vcombine.high %v89, %v89
    %v100 = vmul.f32 %v54, %v65
    %v101 = vmul.f32 %v54, %v73
    %v102 = vmul.f32 %v54, %v72
    %v103 = vmul.f32 %v54, %v74
    %v104 = vmul.f32 %v54, %v82
    %v105 = vmul.f32 %v54, %v90
    %v106 = vmul.f32 %v54, %v89
    %v107 = vmul.f32 %v54, %v91
    %v116 = vcombine.low %v100, %v101
    %v117 = vcombine.low %v102, %v103
    %v119 = vunpack.c.l.s4 1983009808
    %v120 = vunpack.c.0.s8 %v119
    %v121 = vlaneseq
    %v122 = vshrl.u32 %v121, 7
    %v123 = vsub.s32 %v120, %v122
    %v124 = vrot.slane %v116, %v123
    %v126 = vunpack.c.l.s4 1983009808
    %v127 = vunpack.c.0.s8 %v126
    %v128 = vlaneseq
    %v129 = vshrl.u32 %v128, 7
    %v130 = vsub.s32 %v127, %v129
    %v131 = vrot.slane %v117, %v130
    %v132 = vcombine.low %v124, %v131
    %v133 = vcombine.low %v104, %v105
    %v134 = vcombine.low %v106, %v107
    %v136 = vunpack.c.l.s4 1983009808
    %v137 = vunpack.c.0.s8 %v136
    %v138 = vlaneseq
    %v139 = vshrl.u32 %v138, 7
    %v140 = vsub.s32 %v137, %v139
    %v141 = vrot.slane %v133, %v140
    %v143 = vunpack.c.l.s4 1983009808
    %v144 = vunpack.c.0.s8 %v143
    %v145 = vlaneseq
    %v146 = vshrl.u32 %v145, 7
    %v147 = vsub.s32 %v144, %v146
    %v148 = vrot.slane %v134, %v147
    %v149 = vcombine.low %v141, %v148
    %152 = vst [vmem:[#allocation7] sm:$0xff] %v132
    %153 = vst [vmem:[#allocation7 + $0x8] sm:$0xff] %v149
    // Predicated region
    $region22: #{tpu_custom_call.1} parent=1 // pred_check
      _
    $region23: #{tpu_custom_call.1} parent=1 // pred_check_branch
      %155 = sbr.rel (0) target = $region25
    $region24: #{tpu_custom_call.1} parent=1 // pred_region
      %s157 = ssub.s32 256, 256
      %158 = vsyncadd [#allocation4], %s157
      %s160 = sshll.u32 [#allocation7], 4
      %s161 = int_to_ptr.vmem [resolvable:$true] %s160
      %163 = dma.vmem_to_hbm [thread:$0]  %s161, 256, %s3, [#allocation4]
    $region25: #{tpu_custom_call.1} parent=1 // pred_fallthru
      _
    // Predicated region
    $region26: #{tpu_custom_call.1} parent=1 // pred_check
      _
    $region27: #{tpu_custom_call.1} parent=1 // pred_check_branch
      %165 = sbr.rel (0) target = $region29
    $region28: #{tpu_custom_call.1} parent=1 // pred_region
      %166 = dma.done [#allocation4], 256
    $region29: #{tpu_custom_call.1} parent=1 // pred_fallthru
      _
    %167 = vsyncpa [#allocation3], 1
    %168 = vsyncpa [#allocation6], 1
    %169 = vsyncpa [#allocation4], 1

</llo_original>
